<compile_context>
chip_gen: v6e
topology: v6e:2x2x1
jax: 0.10.0
libtpu: 0.0.40
codegen_flags: <defaults>
</compile_context>

<pallas_src>
import jax
import jax.numpy as jnp
from jax.experimental import pallas as pl
from jax.experimental.pallas import tpu as pltpu

_GATHER_K = 8        # embedding rows gathered per grid step in stage 1
_BAG_TILE = 64       # bags processed per grid step in stage 2
_CLASS_PAD = 128     # lane-dense padded class dimension


# ----------------------------- Stage 1: HBM row gather -----------------------------

def _gather_kernel(ids_ref, *refs):
    """refs = (_GATHER_K gathered (1,1,E) embedding rows..., (K,1,E) output block)."""
    del ids_ref  # only consumed by the index_maps
    out_ref = refs[-1]
    for k in range(_GATHER_K):
        out_ref[k] = refs[k][0]


def _gather_index_map(k):
    def index_map(step, ids_ref):
        # block size along vocab is 1, so the block index IS the row (token id)
        return (ids_ref[step * _GATHER_K + k], 0, 0)
    return index_map


def _gather_rows(emb_w, ids_pad):
    """DMA-gather the rows emb_w[ids_pad] from HBM; returns (T_pad, E) float32."""
    V, E = emb_w.shape
    T_pad = ids_pad.shape[0]
    emb_3d = emb_w.reshape(V, 1, E)           # (1, E) row tiles == full trailing dims
    in_specs = [pl.BlockSpec((1, 1, E), _gather_index_map(k)) for k in range(_GATHER_K)]
    out = pl.pallas_call(
        _gather_kernel,
        out_shape=jax.ShapeDtypeStruct((T_pad, 1, E), emb_w.dtype),
        grid_spec=pltpu.PrefetchScalarGridSpec(
            num_scalar_prefetch=1,
            grid=(T_pad // _GATHER_K,),
            in_specs=in_specs,
            out_specs=pl.BlockSpec((_GATHER_K, 1, E), lambda step, ids: (step, 0, 0)),
        ),
        compiler_params=pltpu.CompilerParams(dimension_semantics=("arbitrary",)),
    )(ids_pad, *([emb_3d] * _GATHER_K))
    return out.reshape(T_pad, E)


# ------------------------- Stage 2: mean-pool + fc1 + fc2 --------------------------

def _pool_mlp_kernel(bag_ids_ref, lens_ref, tok_emb_ref,
                     w1_ref, b1_ref, w2_ref, b2_ref, out_ref):
    tile = pl.program_id(0)
    TB = out_ref.shape[0]
    T_pad = tok_emb_ref.shape[0]

    # 0/1 bag-membership matrix for this tile of bags (exact in bf16)
    bag_ids = bag_ids_ref[...]                                            # (1, T_pad) int32
    local = jax.lax.broadcasted_iota(jnp.int32, (TB, T_pad), 0) + tile * TB
    bag_mat = jnp.where(local == bag_ids, 1.0, 0.0).astype(jnp.bfloat16)  # (TB, T_pad)

    # sum-pool on the MXU; scale by 1/len afterwards (only TB*E ops, empty bag -> 0)
    pooled = jnp.dot(bag_mat, tok_emb_ref[...].astype(jnp.bfloat16),
                     preferred_element_type=jnp.float32)                  # (TB, E)
    lens = lens_ref[...].astype(jnp.float32)                              # (TB, 1)
    embedded = pooled * (1.0 / jnp.maximum(lens, 1.0))

    # fc1 / fc2: bf16 MXU operands, f32 accumulation
    h = jnp.dot(embedded.astype(jnp.bfloat16), w1_ref[...].astype(jnp.bfloat16),
                preferred_element_type=jnp.float32) + b1_ref[...]         # (TB, H)
    logits = jnp.dot(h.astype(jnp.bfloat16), w2_ref[...].astype(jnp.bfloat16),
                     preferred_element_type=jnp.float32) + b2_ref[...]    # (TB, CLASS_PAD)
    out_ref[...] = logits.astype(out_ref.dtype)


# ------------------------------------ wrapper ---------------------------------------

def text_classification_forward(text, offsets, params):
    """text: (T,) int32 flat token ids; offsets: (B,) int32 bag starts (PyTorch style).
    Returns (B, num_class) float32 logits."""
    emb_w, fc1_w, fc1_b, fc2_w, fc2_b = params
    T = text.shape[0]
    B = offsets.shape[0]
    V, E = emb_w.shape
    H = fc1_w.shape[0]
    C = fc2_w.shape[0]

    text = text.astype(jnp.int32)
    offsets = offsets.astype(jnp.int32)

    # ---- glue: padding + O(T+B) index math ----
    T_pad = ((T + _GATHER_K - 1) // _GATHER_K) * _GATHER_K
    B_pad = ((B + _BAG_TILE - 1) // _BAG_TILE) * _BAG_TILE

    ids_pad = jnp.zeros((T_pad,), jnp.int32).at[:T].set(text)

    pos = jnp.arange(T, dtype=jnp.int32)
    bag_of_token = (jnp.searchsorted(offsets, pos, side='right') - 1).astype(jnp.int32)
    bag_ids_pad = jnp.full((1, T_pad), -1, jnp.int32).at[0, :T].set(bag_of_token)

    ends = jnp.concatenate([offsets[1:], jnp.array([T], jnp.int32)])
    lens_pad = jnp.zeros((B_pad, 1), jnp.int32).at[:B, 0].set(ends - offsets)

    # pre-transpose Linear weights to (in, out); zero-pad class dim to 128 lanes
    w1_t = fc1_w.T.astype(jnp.float32)                                   # (E, H)
    b1_2d = fc1_b.reshape(1, H).astype(jnp.float32)
    w2_pad = jnp.zeros((H, _CLASS_PAD), jnp.float32).at[:, :C].set(fc2_w.T)
    b2_pad = jnp.zeros((1, _CLASS_PAD), jnp.float32).at[0, :C].set(fc2_b)

    # ---- Stage 1: gather only the referenced embedding rows from HBM ----
    tok_emb = _gather_rows(emb_w.astype(jnp.float32), ids_pad)           # (T_pad, E)

    # ---- Stage 2: mean pool + fc1 + fc2, tiled over bags (parallel across TCs) ----
    # TODO(synk): for very long batches, also tile T_pad as an extra "arbitrary"
    # reduction grid axis instead of keeping the gathered rows fully resident in VMEM.
    out_pad = pl.pallas_call(
        _pool_mlp_kernel,
        out_shape=jax.ShapeDtypeStruct((B_pad, _CLASS_PAD), jnp.float32),
        grid=(B_pad // _BAG_TILE,),
        in_specs=[
            pl.BlockSpec((1, T_pad), lambda i: (0, 0)),                  # bag id per token
            pl.BlockSpec((_BAG_TILE, 1), lambda i: (i, 0)),              # bag lengths
            pl.BlockSpec((T_pad, E), lambda i: (0, 0)),                  # gathered rows
            pl.BlockSpec((E, H), lambda i: (0, 0)),                      # fc1 weight^T
            pl.BlockSpec((1, H), lambda i: (0, 0)),                      # fc1 bias
            pl.BlockSpec((H, _CLASS_PAD), lambda i: (0, 0)),             # fc2 weight^T (padded)
            pl.BlockSpec((1, _CLASS_PAD), lambda i: (0, 0)),             # fc2 bias (padded)
        ],
        out_specs=pl.BlockSpec((_BAG_TILE, _CLASS_PAD), lambda i: (i, 0)),
        compiler_params=pltpu.CompilerParams(dimension_semantics=("parallel",)),
    )(bag_ids_pad, lens_pad, tok_emb, w1_t, b1_2d, w2_pad, b2_pad)

    return out_pad[:B, :C]


# --------------------------------- params / reference -------------------------------

def init_params(key, vocab_size, embed_dim, hidden_dim, num_class):
    initrange = 0.5
    k_emb, k_fc1, k_fc2 = jax.random.split(key, 3)
    emb_w = jax.random.uniform(k_emb, (vocab_size, embed_dim), jnp.float32, -initrange, initrange)
    fc1_w = jax.random.uniform(k_fc1, (hidden_dim, embed_dim), jnp.float32, -initrange, initrange)
    fc1_b = jnp.zeros((hidden_dim,), jnp.float32)
    fc2_w = jax.random.uniform(k_fc2, (num_class, hidden_dim), jnp.float32, -initrange, initrange)
    fc2_b = jnp.zeros((num_class,), jnp.float32)
    return emb_w, fc1_w, fc1_b, fc2_w, fc2_b


def reference_forward(text, offsets, params):
    """Pure-JAX f32 reference (EmbeddingBag mean -> fc1 -> fc2)."""
    emb_w, fc1_w, fc1_b, fc2_w, fc2_b = params
    T = text.shape[0]
    B = offsets.shape[0]
    tok = emb_w[text]                                                    # (T, E)
    seg = jnp.searchsorted(offsets, jnp.arange(T, dtype=jnp.int32), side='right') - 1
    mask = (jnp.arange(B, dtype=jnp.int32)[:, None] == seg[None, :]).astype(jnp.float32)
    ends = jnp.concatenate([offsets[1:], jnp.array([T], jnp.int32)])
    lens = jnp.maximum(ends - offsets, 1).astype(jnp.float32)[:, None]
    embedded = (mask @ tok) / lens
    h = embedded @ fc1_w.T + fc1_b
    return h @ fc2_w.T + fc2_b


if __name__ == "__main__":
    vocab_size = 1000
    embed_dim = 64      # emsize
    hidden_dim = 32
    num_class = 4
    B = 128             # bags per call: fills MXU sublanes, gives a 2-wide parallel grid

    key = jax.random.PRNGKey(0)
    k_params, k_text = jax.random.split(key)
    params = init_params(k_params, vocab_size, embed_dim, hidden_dim, num_class)

    # unequal bag lengths 1..8 (deterministic), PyTorch-style offsets; T = 576
    lengths = (jnp.arange(B, dtype=jnp.int32) % 8) + 1
    offsets = jnp.concatenate([jnp.zeros((1,), jnp.int32),
                               jnp.cumsum(lengths)[:-1].astype(jnp.int32)])
    T = int(jnp.sum(lengths))
    text = jax.random.randint(k_text, (T,), 0, vocab_size, dtype=jnp.int32)

    out = jax.block_until_ready(text_classification_forward(text, offsets, params))
    assert out.shape == (B, num_class)

    ref = jax.block_until_ready(reference_forward(text, offsets, params))
    max_err = float(jnp.max(jnp.abs(out - ref)))
    assert max_err < 1e-1, f"kernel deviates from reference: max |err| = {max_err}"

    print("KERNEL_OK")
</pallas_src>

<mosaic_0001>
module attributes {stable_mosaic.version = 11 : i64} {
  func.func @_gather_kernel(%arg0: i32, %arg1: memref<576xi32, #tpu.memory_space<smem>>, %arg2: memref<1x1x64xf32, #tpu.memory_space<vmem>>, %arg3: memref<1x1x64xf32, #tpu.memory_space<vmem>>, %arg4: memref<1x1x64xf32, #tpu.memory_space<vmem>>, %arg5: memref<1x1x64xf32, #tpu.memory_space<vmem>>, %arg6: memref<1x1x64xf32, #tpu.memory_space<vmem>>, %arg7: memref<1x1x64xf32, #tpu.memory_space<vmem>>, %arg8: memref<1x1x64xf32, #tpu.memory_space<vmem>>, %arg9: memref<1x1x64xf32, #tpu.memory_space<vmem>>, %arg10: memref<8x1x64xf32, #tpu.memory_space<vmem>>) attributes {dimension_semantics = [#tpu.dimension_semantics<arbitrary>], iteration_bounds = array<i64: 72>, scalar_prefetch = 1 : i64, scratch_operands = 0 : i64, tpu.core_type = #tpu.core_type<tc>, window_params = [{transform_indices = @transform_0, window_bounds = array<i64: 1, 1, 64>}, {transform_indices = @transform_1, window_bounds = array<i64: 1, 1, 64>}, {transform_indices = @transform_2, window_bounds = array<i64: 1, 1, 64>}, {transform_indices = @transform_3, window_bounds = array<i64: 1, 1, 64>}, {transform_indices = @transform_4, window_bounds = array<i64: 1, 1, 64>}, {transform_indices = @transform_5, window_bounds = array<i64: 1, 1, 64>}, {transform_indices = @transform_6, window_bounds = array<i64: 1, 1, 64>}, {transform_indices = @transform_7, window_bounds = array<i64: 1, 1, 64>}, {transform_indices = @transform_8, window_bounds = array<i64: 8, 1, 64>}]} {
    %c0 = arith.constant 0 : index
    %c0_0 = arith.constant 0 : index
    %c0_1 = arith.constant 0 : index
    %0 = vector.load %arg2[%c0, %c0_0, %c0_1] : memref<1x1x64xf32, #tpu.memory_space<vmem>>, vector<1x1x64xf32>
    %1 = vector.shape_cast %0 : vector<1x1x64xf32> to vector<1x64xf32>
    %c0_2 = arith.constant 0 : index
    %c0_3 = arith.constant 0 : index
    %c0_4 = arith.constant 0 : index
    %2 = vector.load %arg10[%c0_2, %c0_3, %c0_4] : memref<8x1x64xf32, #tpu.memory_space<vmem>>, vector<1x1x64xf32>
    %3 = vector.shape_cast %2 : vector<1x1x64xf32> to vector<1x64xf32>
    %4 = vector.shape_cast %1 : vector<1x64xf32> to vector<1x1x64xf32>
    tpu.vector_store %arg10[%c0_2, %c0_3, %c0_4], %4 {strides = array<i32>} : memref<8x1x64xf32, #tpu.memory_space<vmem>>, vector<1x1x64xf32>,
    %c0_5 = arith.constant 0 : index
    %c0_6 = arith.constant 0 : index
    %c0_7 = arith.constant 0 : index
    %5 = vector.load %arg3[%c0_5, %c0_6, %c0_7] : memref<1x1x64xf32, #tpu.memory_space<vmem>>, vector<1x1x64xf32>
    %6 = vector.shape_cast %5 : vector<1x1x64xf32> to vector<1x64xf32>
    %c1 = arith.constant 1 : index
    %c0_8 = arith.constant 0 : index
    %c0_9 = arith.constant 0 : index
    %7 = vector.load %arg10[%c1, %c0_8, %c0_9] : memref<8x1x64xf32, #tpu.memory_space<vmem>>, vector<1x1x64xf32>
    %8 = vector.shape_cast %7 : vector<1x1x64xf32> to vector<1x64xf32>
    %9 = vector.shape_cast %6 : vector<1x64xf32> to vector<1x1x64xf32>
    tpu.vector_store %arg10[%c1, %c0_8, %c0_9], %9 {strides = array<i32>} : memref<8x1x64xf32, #tpu.memory_space<vmem>>, vector<1x1x64xf32>,
    %c0_10 = arith.constant 0 : index
    %c0_11 = arith.constant 0 : index
    %c0_12 = arith.constant 0 : index
    %10 = vector.load %arg4[%c0_10, %c0_11, %c0_12] : memref<1x1x64xf32, #tpu.memory_space<vmem>>, vector<1x1x64xf32>
    %11 = vector.shape_cast %10 : vector<1x1x64xf32> to vector<1x64xf32>
    %c2 = arith.constant 2 : index
    %c0_13 = arith.constant 0 : index
    %c0_14 = arith.constant 0 : index
    %12 = vector.load %arg10[%c2, %c0_13, %c0_14] : memref<8x1x64xf32, #tpu.memory_space<vmem>>, vector<1x1x64xf32>
    %13 = vector.shape_cast %12 : vector<1x1x64xf32> to vector<1x64xf32>
    %14 = vector.shape_cast %11 : vector<1x64xf32> to vector<1x1x64xf32>
    tpu.vector_store %arg10[%c2, %c0_13, %c0_14], %14 {strides = array<i32>} : memref<8x1x64xf32, #tpu.memory_space<vmem>>, vector<1x1x64xf32>,
    %c0_15 = arith.constant 0 : index
    %c0_16 = arith.constant 0 : index
    %c0_17 = arith.constant 0 : index
    %15 = vector.load %arg5[%c0_15, %c0_16, %c0_17] : memref<1x1x64xf32, #tpu.memory_space<vmem>>, vector<1x1x64xf32>
    %16 = vector.shape_cast %15 : vector<1x1x64xf32> to vector<1x64xf32>
    %c3 = arith.constant 3 : index
    %c0_18 = arith.constant 0 : index
    %c0_19 = arith.constant 0 : index
    %17 = vector.load %arg10[%c3, %c0_18, %c0_19] : memref<8x1x64xf32, #tpu.memory_space<vmem>>, vector<1x1x64xf32>
    %18 = vector.shape_cast %17 : vector<1x1x64xf32> to vector<1x64xf32>
    %19 = vector.shape_cast %16 : vector<1x64xf32> to vector<1x1x64xf32>
    tpu.vector_store %arg10[%c3, %c0_18, %c0_19], %19 {strides = array<i32>} : memref<8x1x64xf32, #tpu.memory_space<vmem>>, vector<1x1x64xf32>,
    %c0_20 = arith.constant 0 : index
    %c0_21 = arith.constant 0 : index
    %c0_22 = arith.constant 0 : index
    %20 = vector.load %arg6[%c0_20, %c0_21, %c0_22] : memref<1x1x64xf32, #tpu.memory_space<vmem>>, vector<1x1x64xf32>
    %21 = vector.shape_cast %20 : vector<1x1x64xf32> to vector<1x64xf32>
    %c4 = arith.constant 4 : index
    %c0_23 = arith.constant 0 : index
    %c0_24 = arith.constant 0 : index
    %22 = vector.load %arg10[%c4, %c0_23, %c0_24] : memref<8x1x64xf32, #tpu.memory_space<vmem>>, vector<1x1x64xf32>
    %23 = vector.shape_cast %22 : vector<1x1x64xf32> to vector<1x64xf32>
    %24 = vector.shape_cast %21 : vector<1x64xf32> to vector<1x1x64xf32>
    tpu.vector_store %arg10[%c4, %c0_23, %c0_24], %24 {strides = array<i32>} : memref<8x1x64xf32, #tpu.memory_space<vmem>>, vector<1x1x64xf32>,
    %c0_25 = arith.constant 0 : index
    %c0_26 = arith.constant 0 : index
    %c0_27 = arith.constant 0 : index
    %25 = vector.load %arg7[%c0_25, %c0_26, %c0_27] : memref<1x1x64xf32, #tpu.memory_space<vmem>>, vector<1x1x64xf32>
    %26 = vector.shape_cast %25 : vector<1x1x64xf32> to vector<1x64xf32>
    %c5 = arith.constant 5 : index
    %c0_28 = arith.constant 0 : index
    %c0_29 = arith.constant 0 : index
    %27 = vector.load %arg10[%c5, %c0_28, %c0_29] : memref<8x1x64xf32, #tpu.memory_space<vmem>>, vector<1x1x64xf32>
    %28 = vector.shape_cast %27 : vector<1x1x64xf32> to vector<1x64xf32>
    %29 = vector.shape_cast %26 : vector<1x64xf32> to vector<1x1x64xf32>
    tpu.vector_store %arg10[%c5, %c0_28, %c0_29], %29 {strides = array<i32>} : memref<8x1x64xf32, #tpu.memory_space<vmem>>, vector<1x1x64xf32>,
    %c0_30 = arith.constant 0 : index
    %c0_31 = arith.constant 0 : index
    %c0_32 = arith.constant 0 : index
    %30 = vector.load %arg8[%c0_30, %c0_31, %c0_32] : memref<1x1x64xf32, #tpu.memory_space<vmem>>, vector<1x1x64xf32>
    %31 = vector.shape_cast %30 : vector<1x1x64xf32> to vector<1x64xf32>
    %c6 = arith.constant 6 : index
    %c0_33 = arith.constant 0 : index
    %c0_34 = arith.constant 0 : index
    %32 = vector.load %arg10[%c6, %c0_33, %c0_34] : memref<8x1x64xf32, #tpu.memory_space<vmem>>, vector<1x1x64xf32>
    %33 = vector.shape_cast %32 : vector<1x1x64xf32> to vector<1x64xf32>
    %34 = vector.shape_cast %31 : vector<1x64xf32> to vector<1x1x64xf32>
    tpu.vector_store %arg10[%c6, %c0_33, %c0_34], %34 {strides = array<i32>} : memref<8x1x64xf32, #tpu.memory_space<vmem>>, vector<1x1x64xf32>,
    %c0_35 = arith.constant 0 : index
    %c0_36 = arith.constant 0 : index
    %c0_37 = arith.constant 0 : index
    %35 = vector.load %arg9[%c0_35, %c0_36, %c0_37] : memref<1x1x64xf32, #tpu.memory_space<vmem>>, vector<1x1x64xf32>
    %36 = vector.shape_cast %35 : vector<1x1x64xf32> to vector<1x64xf32>
    %c7 = arith.constant 7 : index
    %c0_38 = arith.constant 0 : index
    %c0_39 = arith.constant 0 : index
    %37 = vector.load %arg10[%c7, %c0_38, %c0_39] : memref<8x1x64xf32, #tpu.memory_space<vmem>>, vector<1x1x64xf32>
    %38 = vector.shape_cast %37 : vector<1x1x64xf32> to vector<1x64xf32>
    %39 = vector.shape_cast %36 : vector<1x64xf32> to vector<1x1x64xf32>
    tpu.vector_store %arg10[%c7, %c0_38, %c0_39], %39 {strides = array<i32>} : memref<8x1x64xf32, #tpu.memory_space<vmem>>, vector<1x1x64xf32>,
    return
  }
  func.func @transform_0(%arg0: i32, %arg1: memref<576xi32, #tpu.memory_space<smem>>) -> (i32, i32, i32) {
    %c8_i32 = arith.constant 8 : i32
    %0 = arith.muli %arg0, %c8_i32 : i32
    %c0_i32 = arith.constant 0 : i32
    %1 = arith.addi %0, %c0_i32 : i32
    %2 = arith.index_cast %1 : i32 to index
    %3 = memref.load %arg1[%2] : memref<576xi32, #tpu.memory_space<smem>>
    %c0_i32_0 = arith.constant 0 : i32
    %c0_i32_1 = arith.constant 0 : i32
    %c0_i32_2 = arith.constant 0 : i32
    return %3, %c0_i32_0, %c0_i32_1 : i32, i32, i32
  }
  func.func @transform_1(%arg0: i32, %arg1: memref<576xi32, #tpu.memory_space<smem>>) -> (i32, i32, i32) {
    %c8_i32 = arith.constant 8 : i32
    %0 = arith.muli %arg0, %c8_i32 : i32
    %c1_i32 = arith.constant 1 : i32
    %1 = arith.addi %0, %c1_i32 : i32
    %2 = arith.index_cast %1 : i32 to index
    %3 = memref.load %arg1[%2] : memref<576xi32, #tpu.memory_space<smem>>
    %c0_i32 = arith.constant 0 : i32
    %c0_i32_0 = arith.constant 0 : i32
    %c0_i32_1 = arith.constant 0 : i32
    return %3, %c0_i32, %c0_i32_0 : i32, i32, i32
  }
  func.func @transform_2(%arg0: i32, %arg1: memref<576xi32, #tpu.memory_space<smem>>) -> (i32, i32, i32) {
    %c8_i32 = arith.constant 8 : i32
    %0 = arith.muli %arg0, %c8_i32 : i32
    %c2_i32 = arith.constant 2 : i32
    %1 = arith.addi %0, %c2_i32 : i32
    %2 = arith.index_cast %1 : i32 to index
    %3 = memref.load %arg1[%2] : memref<576xi32, #tpu.memory_space<smem>>
    %c0_i32 = arith.constant 0 : i32
    %c0_i32_0 = arith.constant 0 : i32
    %c0_i32_1 = arith.constant 0 : i32
    return %3, %c0_i32, %c0_i32_0 : i32, i32, i32
  }
  func.func @transform_3(%arg0: i32, %arg1: memref<576xi32, #tpu.memory_space<smem>>) -> (i32, i32, i32) {
    %c8_i32 = arith.constant 8 : i32
    %0 = arith.muli %arg0, %c8_i32 : i32
    %c3_i32 = arith.constant 3 : i32
    %1 = arith.addi %0, %c3_i32 : i32
    %2 = arith.index_cast %1 : i32 to index
    %3 = memref.load %arg1[%2] : memref<576xi32, #tpu.memory_space<smem>>
    %c0_i32 = arith.constant 0 : i32
    %c0_i32_0 = arith.constant 0 : i32
    %c0_i32_1 = arith.constant 0 : i32
    return %3, %c0_i32, %c0_i32_0 : i32, i32, i32
  }
  func.func @transform_4(%arg0: i32, %arg1: memref<576xi32, #tpu.memory_space<smem>>) -> (i32, i32, i32) {
    %c8_i32 = arith.constant 8 : i32
    %0 = arith.muli %arg0, %c8_i32 : i32
    %c4_i32 = arith.constant 4 : i32
    %1 = arith.addi %0, %c4_i32 : i32
    %2 = arith.index_cast %1 : i32 to index
    %3 = memref.load %arg1[%2] : memref<576xi32, #tpu.memory_space<smem>>
    %c0_i32 = arith.constant 0 : i32
    %c0_i32_0 = arith.constant 0 : i32
    %c0_i32_1 = arith.constant 0 : i32
    return %3, %c0_i32, %c0_i32_0 : i32, i32, i32
  }
  func.func @transform_5(%arg0: i32, %arg1: memref<576xi32, #tpu.memory_space<smem>>) -> (i32, i32, i32) {
    %c8_i32 = arith.constant 8 : i32
    %0 = arith.muli %arg0, %c8_i32 : i32
    %c5_i32 = arith.constant 5 : i32
    %1 = arith.addi %0, %c5_i32 : i32
    %2 = arith.index_cast %1 : i32 to index
    %3 = memref.load %arg1[%2] : memref<576xi32, #tpu.memory_space<smem>>
    %c0_i32 = arith.constant 0 : i32
    %c0_i32_0 = arith.constant 0 : i32
    %c0_i32_1 = arith.constant 0 : i32
    return %3, %c0_i32, %c0_i32_0 : i32, i32, i32
  }
  func.func @transform_6(%arg0: i32, %arg1: memref<576xi32, #tpu.memory_space<smem>>) -> (i32, i32, i32) {
    %c8_i32 = arith.constant 8 : i32
    %0 = arith.muli %arg0, %c8_i32 : i32
    %c6_i32 = arith.constant 6 : i32
    %1 = arith.addi %0, %c6_i32 : i32
    %2 = arith.index_cast %1 : i32 to index
    %3 = memref.load %arg1[%2] : memref<576xi32, #tpu.memory_space<smem>>
    %c0_i32 = arith.constant 0 : i32
    %c0_i32_0 = arith.constant 0 : i32
    %c0_i32_1 = arith.constant 0 : i32
    return %3, %c0_i32, %c0_i32_0 : i32, i32, i32
  }
  func.func @transform_7(%arg0: i32, %arg1: memref<576xi32, #tpu.memory_space<smem>>) -> (i32, i32, i32) {
    %c8_i32 = arith.constant 8 : i32
    %0 = arith.muli %arg0, %c8_i32 : i32
    %c7_i32 = arith.constant 7 : i32
    %1 = arith.addi %0, %c7_i32 : i32
    %2 = arith.index_cast %1 : i32 to index
    %3 = memref.load %arg1[%2] : memref<576xi32, #tpu.memory_space<smem>>
    %c0_i32 = arith.constant 0 : i32
    %c0_i32_0 = arith.constant 0 : i32
    %c0_i32_1 = arith.constant 0 : i32
    return %3, %c0_i32, %c0_i32_0 : i32, i32, i32
  }
  func.func @transform_8(%arg0: i32, %arg1: memref<576xi32, #tpu.memory_space<smem>>) -> (i32, i32, i32) {
    %c0_i32 = arith.constant 0 : i32
    %c0_i32_0 = arith.constant 0 : i32
    %c0_i32_1 = arith.constant 0 : i32
    return %arg0, %c0_i32, %c0_i32_0 : i32, i32, i32
  }
}

</mosaic_0001>

<llo_original>
// kernel: tpu_custom_call.1
$region0: #{tpu_custom_call.1}
  #allocation0 [shape = 'u32[]', space=smem, size = 0x4, offset = 0x4, fixed_abs, tag = 'smem constant byte address 0x4 - core index']
  #allocation1 [shape = 'u32[144,128]{1,0:T(1,128)}', space=vmem, size = 0x12000, scoped, tag = 'internal scratch']
  #allocation2 [shape = 's32[1]{0}', space=sflag, size = 0x4, scoped, tag = 'scoped memory for tpu_custom_call.1']
  #allocation3 [shape = 'u8[2560]{0}', space=smem, size = 0xa00, scoped, tag = 'prefetched SMEM operand 0']
  %s0 = inlined_call_operand.vmem [shape: s32[576], index: 0, kind: input, shape index: {}]
  %s1 = inlined_call_operand.vmem [shape: f32[1000,1,64], index: 1, kind: input, shape index: {}]
  %s2 = inlined_call_operand.vmem [shape: f32[1000,1,64], index: 2, kind: input, shape index: {}]
  %s3 = inlined_call_operand.vmem [shape: f32[1000,1,64], index: 3, kind: input, shape index: {}]
  %s4 = inlined_call_operand.vmem [shape: f32[1000,1,64], index: 4, kind: input, shape index: {}]
  %s5 = inlined_call_operand.vmem [shape: f32[1000,1,64], index: 5, kind: input, shape index: {}]
  %s6 = inlined_call_operand.vmem [shape: f32[1000,1,64], index: 6, kind: input, shape index: {}]
  %s7 = inlined_call_operand.vmem [shape: f32[1000,1,64], index: 7, kind: input, shape index: {}]
  %s8 = inlined_call_operand.vmem [shape: f32[1000,1,64], index: 8, kind: input, shape index: {}]
  %s9 = inlined_call_operand.vmem [shape: f32[576,1,64], index: 9, kind: output, shape index: {}]
  %s10 = sld [smem:[#allocation0]]
  $region65: #{tpu_custom_call.1} parent=0
    _
  %s12 = ssub.s32 1, %s10
  %s13 = scalar_select 0, %s12, %s10
  %s14 = sshll.u32 %s0, 4
  %s15 = int_to_ptr.vmem [resolvable:$true] %s14
  %17 = dma.vmem_to_smem %s15, 80, [#allocation3], [#allocation2]
  %18 = dma.done [#allocation2], 80
  %19 = sfence
  loop: start=0, step=1, limit=74
  $region2: #{tpu_custom_call.1} parent=0 // loop_pre_header
    _
  $region3: #{tpu_custom_call.1} parent=0 // loop_header
    %s21 = sphi 0, %s25
    %p22 = scmp.ge.s32.totalorder %s21, 74
    %s35 = sphi 0, %s37
    %s38 = sphi 0, %s35
    %s39 = sphi 0, %s38
    %s55 = sphi 0, %s39
    %s67 = sphi 0, %s69
    %s70 = sphi 0, %s67
    %s71 = sphi 0, %s70
    %s87 = sphi 0, %s71
    %s99 = sphi 0, %s101
    %s102 = sphi 0, %s99
    %s103 = sphi 0, %s102
    %s119 = sphi 0, %s103
    %s131 = sphi 0, %s133
    %s134 = sphi 0, %s131
    %s135 = sphi 0, %s134
    %s151 = sphi 0, %s135
    %s163 = sphi 0, %s165
    %s166 = sphi 0, %s163
    %s167 = sphi 0, %s166
    %s183 = sphi 0, %s167
    %s195 = sphi 0, %s197
    %s198 = sphi 0, %s195
    %s199 = sphi 0, %s198
    %s215 = sphi 0, %s199
    %s227 = sphi 0, %s229
    %s230 = sphi 0, %s227
    %s231 = sphi 0, %s230
    %s247 = sphi 0, %s231
    %s259 = sphi 0, %s261
    %s262 = sphi 0, %s259
    %s263 = sphi 0, %s262
    %s279 = sphi 0, %s263
    %s285 = sphi 0, %s287
    %s288 = sphi 0, %s285
    %s289 = sphi 0, %s288
    %s305 = sphi 0, %s289
  $region4: #{tpu_custom_call.1} parent=0 // loop_header_branch
    %24 = sbr.rel (%p22) target = $region8
  $region5: #{tpu_custom_call.1} parent=0 // loop_body
    %s26 = ssub.s32 %s21, 1
    %s27 = ssub.s32 %s21, 2
    %s28 = sadd.s32 %s21, 1
    %s29 = smul.u32 %s21, 8
    %s30 = sld [smem:[#allocation3 + %s29]]
    %s31 = smul.u32 %s28, 8
    %s32 = sld [smem:[#allocation3 + %s31]]
    %s33 = ssub.s32 %s30, %s32
    %p34 = scmp.eq.s32.totalorder %s33, 0
    %s36 = sadd.s32 %s35, 1
    %s37 = scalar_select %p34, %s35, %s36
    %p40 = pneg %p34
    %p41 = scmp.eq.s32.totalorder %s21, 71
    %p42 = por %p40, %p41
    %p43 = scmp.ne.s32.totalorder %s35, %s38
    %p44 = scmp.eq.s32.totalorder %s21, 0
    %p45 = por %p43, %p44
    %p46 = scmp.ne.s32.totalorder %s35, %s38
    %p47 = scmp.eq.s32.totalorder %s26, 71
    %p48 = por %p46, %p47
    %p49 = scmp.ne.s32.totalorder %s38, %s39
    %p50 = scmp.eq.s32.totalorder %s26, 0
    %p51 = por %p49, %p50
    %p52 = scmp.ne.s32.totalorder %s38, %s39
    %p53 = scmp.eq.s32.totalorder %s27, 71
    %p54 = por %p52, %p53
    %p56 = scmp.ne.s32.totalorder %s39, %s55
    %p57 = scmp.eq.s32.totalorder %s27, 0
    %p58 = por %p56, %p57
    %s59 = smul.u32 %s21, 8
    %s60 = sadd.s32 %s59, 1
    %s61 = sld [smem:[#allocation3 + %s60]]
    %s62 = smul.u32 %s28, 8
    %s63 = sadd.s32 %s62, 1
    %s64 = sld [smem:[#allocation3 + %s63]]
    %s65 = ssub.s32 %s61, %s64
    %p66 = scmp.eq.s32.totalorder %s65, 0
    %s68 = sadd.s32 %s67, 1
    %s69 = scalar_select %p66, %s67, %s68
    %p72 = pneg %p66
    %p73 = scmp.eq.s32.totalorder %s21, 71
    %p74 = por %p72, %p73
    %p75 = scmp.ne.s32.totalorder %s67, %s70
    %p76 = scmp.eq.s32.totalorder %s21, 0
    %p77 = por %p75, %p76
    %p78 = scmp.ne.s32.totalorder %s67, %s70
    %p79 = scmp.eq.s32.totalorder %s26, 71
    %p80 = por %p78, %p79
    %p81 = scmp.ne.s32.totalorder %s70, %s71
    %p82 = scmp.eq.s32.totalorder %s26, 0
    %p83 = por %p81, %p82
    %p84 = scmp.ne.s32.totalorder %s70, %s71
    %p85 = scmp.eq.s32.totalorder %s27, 71
    %p86 = por %p84, %p85
    %p88 = scmp.ne.s32.totalorder %s71, %s87
    %p89 = scmp.eq.s32.totalorder %s27, 0
    %p90 = por %p88, %p89
    %s91 = smul.u32 %s21, 8
    %s92 = sadd.s32 %s91, 2
    %s93 = sld [smem:[#allocation3 + %s92]]
    %s94 = smul.u32 %s28, 8
    %s95 = sadd.s32 %s94, 2
    %s96 = sld [smem:[#allocation3 + %s95]]
    %s97 = ssub.s32 %s93, %s96
    %p98 = scmp.eq.s32.totalorder %s97, 0
    %s100 = sadd.s32 %s99, 1
    %s101 = scalar_select %p98, %s99, %s100
    %p104 = pneg %p98
    %p105 = scmp.eq.s32.totalorder %s21, 71
    %p106 = por %p104, %p105
    %p107 = scmp.ne.s32.totalorder %s99, %s102
    %p108 = scmp.eq.s32.totalorder %s21, 0
    %p109 = por %p107, %p108
    %p110 = scmp.ne.s32.totalorder %s99, %s102
    %p111 = scmp.eq.s32.totalorder %s26, 71
    %p112 = por %p110, %p111
    %p113 = scmp.ne.s32.totalorder %s102, %s103
    %p114 = scmp.eq.s32.totalorder %s26, 0
    %p115 = por %p113, %p114
    %p116 = scmp.ne.s32.totalorder %s102, %s103
    %p117 = scmp.eq.s32.totalorder %s27, 71
    %p118 = por %p116, %p117
    %p120 = scmp.ne.s32.totalorder %s103, %s119
    %p121 = scmp.eq.s32.totalorder %s27, 0
    %p122 = por %p120, %p121
    %s123 = smul.u32 %s21, 8
    %s124 = sadd.s32 %s123, 3
    %s125 = sld [smem:[#allocation3 + %s124]]
    %s126 = smul.u32 %s28, 8
    %s127 = sadd.s32 %s126, 3
    %s128 = sld [smem:[#allocation3 + %s127]]
    %s129 = ssub.s32 %s125, %s128
    %p130 = scmp.eq.s32.totalorder %s129, 0
    %s132 = sadd.s32 %s131, 1
    %s133 = scalar_select %p130, %s131, %s132
    %p136 = pneg %p130
    %p137 = scmp.eq.s32.totalorder %s21, 71
    %p138 = por %p136, %p137
    %p139 = scmp.ne.s32.totalorder %s131, %s134
    %p140 = scmp.eq.s32.totalorder %s21, 0
    %p141 = por %p139, %p140
    %p142 = scmp.ne.s32.totalorder %s131, %s134
    %p143 = scmp.eq.s32.totalorder %s26, 71
    %p144 = por %p142, %p143
    %p145 = scmp.ne.s32.totalorder %s134, %s135
    %p146 = scmp.eq.s32.totalorder %s26, 0
    %p147 = por %p145, %p146
    %p148 = scmp.ne.s32.totalorder %s134, %s135
    %p149 = scmp.eq.s32.totalorder %s27, 71
    %p150 = por %p148, %p149
    %p152 = scmp.ne.s32.totalorder %s135, %s151
    %p153 = scmp.eq.s32.totalorder %s27, 0
    %p154 = por %p152, %p153
    %s155 = smul.u32 %s21, 8
    %s156 = sadd.s32 %s155, 4
    %s157 = sld [smem:[#allocation3 + %s156]]
    %s158 = smul.u32 %s28, 8
    %s159 = sadd.s32 %s158, 4
    %s160 = sld [smem:[#allocation3 + %s159]]
    %s161 = ssub.s32 %s157, %s160
    %p162 = scmp.eq.s32.totalorder %s161, 0
    %s164 = sadd.s32 %s163, 1
    %s165 = scalar_select %p162, %s163, %s164
    %p168 = pneg %p162
    %p169 = scmp.eq.s32.totalorder %s21, 71
    %p170 = por %p168, %p169
    %p171 = scmp.ne.s32.totalorder %s163, %s166
    %p172 = scmp.eq.s32.totalorder %s21, 0
    %p173 = por %p171, %p172
    %p174 = scmp.ne.s32.totalorder %s163, %s166
    %p175 = scmp.eq.s32.totalorder %s26, 71
    %p176 = por %p174, %p175
    %p177 = scmp.ne.s32.totalorder %s166, %s167
    %p178 = scmp.eq.s32.totalorder %s26, 0
    %p179 = por %p177, %p178
    %p180 = scmp.ne.s32.totalorder %s166, %s167
    %p181 = scmp.eq.s32.totalorder %s27, 71
    %p182 = por %p180, %p181
    %p184 = scmp.ne.s32.totalorder %s167, %s183
    %p185 = scmp.eq.s32.totalorder %s27, 0
    %p186 = por %p184, %p185
    %s187 = smul.u32 %s21, 8
    %s188 = sadd.s32 %s187, 5
    %s189 = sld [smem:[#allocation3 + %s188]]
    %s190 = smul.u32 %s28, 8
    %s191 = sadd.s32 %s190, 5
    %s192 = sld [smem:[#allocation3 + %s191]]
    %s193 = ssub.s32 %s189, %s192
    %p194 = scmp.eq.s32.totalorder %s193, 0
    %s196 = sadd.s32 %s195, 1
    %s197 = scalar_select %p194, %s195, %s196
    %p200 = pneg %p194
    %p201 = scmp.eq.s32.totalorder %s21, 71
    %p202 = por %p200, %p201
    %p203 = scmp.ne.s32.totalorder %s195, %s198
    %p204 = scmp.eq.s32.totalorder %s21, 0
    %p205 = por %p203, %p204
    %p206 = scmp.ne.s32.totalorder %s195, %s198
    %p207 = scmp.eq.s32.totalorder %s26, 71
    %p208 = por %p206, %p207
    %p209 = scmp.ne.s32.totalorder %s198, %s199
    %p210 = scmp.eq.s32.totalorder %s26, 0
    %p211 = por %p209, %p210
    %p212 = scmp.ne.s32.totalorder %s198, %s199
    %p213 = scmp.eq.s32.totalorder %s27, 71
    %p214 = por %p212, %p213
    %p216 = scmp.ne.s32.totalorder %s199, %s215
    %p217 = scmp.eq.s32.totalorder %s27, 0
    %p218 = por %p216, %p217
    %s219 = smul.u32 %s21, 8
    %s220 = sadd.s32 %s219, 6
    %s221 = sld [smem:[#allocation3 + %s220]]
    %s222 = smul.u32 %s28, 8
    %s223 = sadd.s32 %s222, 6
    %s224 = sld [smem:[#allocation3 + %s223]]
    %s225 = ssub.s32 %s221, %s224
    %p226 = scmp.eq.s32.totalorder %s225, 0
    %s228 = sadd.s32 %s227, 1
    %s229 = scalar_select %p226, %s227, %s228
    %p232 = pneg %p226
    %p233 = scmp.eq.s32.totalorder %s21, 71
    %p234 = por %p232, %p233
    %p235 = scmp.ne.s32.totalorder %s227, %s230
    %p236 = scmp.eq.s32.totalorder %s21, 0
    %p237 = por %p235, %p236
    %p238 = scmp.ne.s32.totalorder %s227, %s230
    %p239 = scmp.eq.s32.totalorder %s26, 71
    %p240 = por %p238, %p239
    %p241 = scmp.ne.s32.totalorder %s230, %s231
    %p242 = scmp.eq.s32.totalorder %s26, 0
    %p243 = por %p241, %p242
    %p244 = scmp.ne.s32.totalorder %s230, %s231
    %p245 = scmp.eq.s32.totalorder %s27, 71
    %p246 = por %p244, %p245
    %p248 = scmp.ne.s32.totalorder %s231, %s247
    %p249 = scmp.eq.s32.totalorder %s27, 0
    %p250 = por %p248, %p249
    %s251 = smul.u32 %s21, 8
    %s252 = sadd.s32 %s251, 7
    %s253 = sld [smem:[#allocation3 + %s252]]
    %s254 = smul.u32 %s28, 8
    %s255 = sadd.s32 %s254, 7
    %s256 = sld [smem:[#allocation3 + %s255]]
    %s257 = ssub.s32 %s253, %s256
    %p258 = scmp.eq.s32.totalorder %s257, 0
    %s260 = sadd.s32 %s259, 1
    %s261 = scalar_select %p258, %s259, %s260
    %p264 = pneg %p258
    %p265 = scmp.eq.s32.totalorder %s21, 71
    %p266 = por %p264, %p265
    %p267 = scmp.ne.s32.totalorder %s259, %s262
    %p268 = scmp.eq.s32.totalorder %s21, 0
    %p269 = por %p267, %p268
    %p270 = scmp.ne.s32.totalorder %s259, %s262
    %p271 = scmp.eq.s32.totalorder %s26, 71
    %p272 = por %p270, %p271
    %p273 = scmp.ne.s32.totalorder %s262, %s263
    %p274 = scmp.eq.s32.totalorder %s26, 0
    %p275 = por %p273, %p274
    %p276 = scmp.ne.s32.totalorder %s262, %s263
    %p277 = scmp.eq.s32.totalorder %s27, 71
    %p278 = por %p276, %p277
    %p280 = scmp.ne.s32.totalorder %s263, %s279
    %p281 = scmp.eq.s32.totalorder %s27, 0
    %p282 = por %p280, %p281
    %s283 = ssub.s32 %s21, %s28
    %p284 = scmp.eq.s32.totalorder %s283, 0
    %s286 = sadd.s32 %s285, 1
    %s287 = scalar_select %p284, %s285, %s286
    %p290 = pneg %p284
    %p291 = scmp.eq.s32.totalorder %s21, 71
    %p292 = por %p290, %p291
    %p293 = scmp.ne.s32.totalorder %s285, %s288
    %p294 = scmp.eq.s32.totalorder %s21, 0
    %p295 = por %p293, %p294
    %p296 = scmp.ne.s32.totalorder %s285, %s288
    %p297 = scmp.eq.s32.totalorder %s26, 71
    %p298 = por %p296, %p297
    %p299 = scmp.ne.s32.totalorder %s288, %s289
    %p300 = scmp.eq.s32.totalorder %s26, 0
    %p301 = por %p299, %p300
    %p302 = scmp.ne.s32.totalorder %s288, %s289
    %p303 = scmp.eq.s32.totalorder %s27, 71
    %p304 = por %p302, %p303
    %p306 = scmp.ne.s32.totalorder %s289, %s305
    %p307 = scmp.eq.s32.totalorder %s27, 0
    %p308 = por %p306, %p307
    %p309 = scmp.le.s32.totalorder 1, %s21
    %p310 = scmp.lt.s32.totalorder %s21, 73
    %p311 = pnand %p309, %p310
    %p312 = pneg %p311
    // Predicated region
    $region9: #{tpu_custom_call.1} parent=5 // pred_check
      _
    $region10: #{tpu_custom_call.1} parent=5 // pred_check_branch
      %314 = sbr.rel (%p311) target = $region12
    $region11: #{tpu_custom_call.1} parent=5 // pred_region
      %s315 = ssub.s32 %s21, 1
    $region12: #{tpu_custom_call.1} parent=5 // pred_fallthru
      _
    %p316 = scmp.lt.s32.totalorder %s21, 72
    // Predicated region
    $region13: #{tpu_custom_call.1} parent=5 // pred_check
      %p317 = pneg %p316
    $region14: #{tpu_custom_call.1} parent=5 // pred_check_branch
      %319 = sbr.rel (%p317) target = $region16
    $region15: #{tpu_custom_call.1} parent=5 // pred_region
      // Predicated region
      $region17: #{tpu_custom_call.1} parent=15 // pred_check
        %p320 = pneg %p45
      $region18: #{tpu_custom_call.1} parent=15 // pred_check_branch
        %322 = sbr.rel (%p320) target = $region20
      $region19: #{tpu_custom_call.1} parent=15 // pred_region
        %s323 = smul.u32 %s21, 8
        %s324 = sld [smem:[#allocation3 + %s323]]
        %p325 = scmp.lt.s32.totalorder %s324, 999
        %s326 = scalar_select %p325, %s324, 999
        %s327 = scalar_lea.vmem %s1, %s326
        %s328 = smul.u32 %s21, 8
        %s329 = sld [smem:[#allocation3 + %s328]]
      $region20: #{tpu_custom_call.1} parent=15 // pred_fallthru
        _
      // Predicated region
      $region21: #{tpu_custom_call.1} parent=15 // pred_check
        %p330 = pneg %p77
      $region22: #{tpu_custom_call.1} parent=15 // pred_check_branch
        %332 = sbr.rel (%p330) target = $region24
      $region23: #{tpu_custom_call.1} parent=15 // pred_region
        %s333 = smul.u32 %s21, 8
        %s334 = sadd.s32 %s333, 1
        %s335 = sld [smem:[#allocation3 + %s334]]
        %p336 = scmp.lt.s32.totalorder %s335, 999
        %s337 = scalar_select %p336, %s335, 999
        %s338 = scalar_lea.vmem %s2, %s337
        %s339 = smul.u32 %s21, 8
        %s340 = sadd.s32 %s339, 1
        %s341 = sld [smem:[#allocation3 + %s340]]
      $region24: #{tpu_custom_call.1} parent=15 // pred_fallthru
        _
      // Predicated region
      $region25: #{tpu_custom_call.1} parent=15 // pred_check
        %p342 = pneg %p109
      $region26: #{tpu_custom_call.1} parent=15 // pred_check_branch
        %344 = sbr.rel (%p342) target = $region28
      $region27: #{tpu_custom_call.1} parent=15 // pred_region
        %s345 = smul.u32 %s21, 8
        %s346 = sadd.s32 %s345, 2
        %s347 = sld [smem:[#allocation3 + %s346]]
        %p348 = scmp.lt.s32.totalorder %s347, 999
        %s349 = scalar_select %p348, %s347, 999
        %s350 = scalar_lea.vmem %s3, %s349
        %s351 = smul.u32 %s21, 8
        %s352 = sadd.s32 %s351, 2
        %s353 = sld [smem:[#allocation3 + %s352]]
      $region28: #{tpu_custom_call.1} parent=15 // pred_fallthru
        _
      // Predicated region
      $region29: #{tpu_custom_call.1} parent=15 // pred_check
        %p354 = pneg %p141
      $region30: #{tpu_custom_call.1} parent=15 // pred_check_branch
        %356 = sbr.rel (%p354) target = $region32
      $region31: #{tpu_custom_call.1} parent=15 // pred_region
        %s357 = smul.u32 %s21, 8
        %s358 = sadd.s32 %s357, 3
        %s359 = sld [smem:[#allocation3 + %s358]]
        %p360 = scmp.lt.s32.totalorder %s359, 999
        %s361 = scalar_select %p360, %s359, 999
        %s362 = scalar_lea.vmem %s4, %s361
        %s363 = smul.u32 %s21, 8
        %s364 = sadd.s32 %s363, 3
        %s365 = sld [smem:[#allocation3 + %s364]]
      $region32: #{tpu_custom_call.1} parent=15 // pred_fallthru
        _
      // Predicated region
      $region33: #{tpu_custom_call.1} parent=15 // pred_check
        %p366 = pneg %p173
      $region34: #{tpu_custom_call.1} parent=15 // pred_check_branch
        %368 = sbr.rel (%p366) target = $region36
      $region35: #{tpu_custom_call.1} parent=15 // pred_region
        %s369 = smul.u32 %s21, 8
        %s370 = sadd.s32 %s369, 4
        %s371 = sld [smem:[#allocation3 + %s370]]
        %p372 = scmp.lt.s32.totalorder %s371, 999
        %s373 = scalar_select %p372, %s371, 999
        %s374 = scalar_lea.vmem %s5, %s373
        %s375 = smul.u32 %s21, 8
        %s376 = sadd.s32 %s375, 4
        %s377 = sld [smem:[#allocation3 + %s376]]
      $region36: #{tpu_custom_call.1} parent=15 // pred_fallthru
        _
      // Predicated region
      $region37: #{tpu_custom_call.1} parent=15 // pred_check
        %p378 = pneg %p205
      $region38: #{tpu_custom_call.1} parent=15 // pred_check_branch
        %380 = sbr.rel (%p378) target = $region40
      $region39: #{tpu_custom_call.1} parent=15 // pred_region
        %s381 = smul.u32 %s21, 8
        %s382 = sadd.s32 %s381, 5
        %s383 = sld [smem:[#allocation3 + %s382]]
        %p384 = scmp.lt.s32.totalorder %s383, 999
        %s385 = scalar_select %p384, %s383, 999
        %s386 = scalar_lea.vmem %s6, %s385
        %s387 = smul.u32 %s21, 8
        %s388 = sadd.s32 %s387, 5
        %s389 = sld [smem:[#allocation3 + %s388]]
      $region40: #{tpu_custom_call.1} parent=15 // pred_fallthru
        _
      // Predicated region
      $region41: #{tpu_custom_call.1} parent=15 // pred_check
        %p390 = pneg %p237
      $region42: #{tpu_custom_call.1} parent=15 // pred_check_branch
        %392 = sbr.rel (%p390) target = $region44
      $region43: #{tpu_custom_call.1} parent=15 // pred_region
        %s393 = smul.u32 %s21, 8
        %s394 = sadd.s32 %s393, 6
        %s395 = sld [smem:[#allocation3 + %s394]]
        %p396 = scmp.lt.s32.totalorder %s395, 999
        %s397 = scalar_select %p396, %s395, 999
        %s398 = scalar_lea.vmem %s7, %s397
        %s399 = smul.u32 %s21, 8
        %s400 = sadd.s32 %s399, 6
        %s401 = sld [smem:[#allocation3 + %s400]]
      $region44: #{tpu_custom_call.1} parent=15 // pred_fallthru
        _
      // Predicated region
      $region45: #{tpu_custom_call.1} parent=15 // pred_check
        %p402 = pneg %p269
      $region46: #{tpu_custom_call.1} parent=15 // pred_check_branch
        %404 = sbr.rel (%p402) target = $region48
      $region47: #{tpu_custom_call.1} parent=15 // pred_region
        %s405 = smul.u32 %s21, 8
        %s406 = sadd.s32 %s405, 7
        %s407 = sld [smem:[#allocation3 + %s406]]
        %p408 = scmp.lt.s32.totalorder %s407, 999
        %s409 = scalar_select %p408, %s407, 999
        %s410 = scalar_lea.vmem %s8, %s409
        %s411 = smul.u32 %s21, 8
        %s412 = sadd.s32 %s411, 7
        %s413 = sld [smem:[#allocation3 + %s412]]
      $region48: #{tpu_custom_call.1} parent=15 // pred_fallthru
        _
    $region16: #{tpu_custom_call.1} parent=5 // pred_fallthru
      _
    %p414 = scmp.le.s32.totalorder 1, %s21
    %p415 = scmp.lt.s32.totalorder %s21, 73
    %p416 = pnand %p414, %p415
    %p417 = pneg %p416
    // Predicated region
    $region49: #{tpu_custom_call.1} parent=5 // pred_check
      _
    $region50: #{tpu_custom_call.1} parent=5 // pred_check_branch
      %419 = sbr.rel (%p416) target = $region52
    $region51: #{tpu_custom_call.1} parent=5 // pred_region
      %s420 = ssub.s32 %s21, 1
      %s421 = smul.u32 %s26, 8
      %s422 = sld [smem:[#allocation3 + %s421]]
      %p423 = scmp.lt.s32.totalorder %s422, 999
      %s424 = scalar_select %p423, %s422, 999
      %s425 = scalar_lea.vmem %s1, %s424
      %p426 = pneg %p51
      %p427 = pneg %p48
      %s428 = smul.u32 %s26, 8
      %s429 = sadd.s32 %s428, 1
      %s430 = sld [smem:[#allocation3 + %s429]]
      %p431 = scmp.lt.s32.totalorder %s430, 999
      %s432 = scalar_select %p431, %s430, 999
      %s433 = scalar_lea.vmem %s2, %s432
      %p434 = pneg %p83
      %p435 = pneg %p80
      %s436 = smul.u32 %s26, 8
      %s437 = sadd.s32 %s436, 2
      %s438 = sld [smem:[#allocation3 + %s437]]
      %p439 = scmp.lt.s32.totalorder %s438, 999
      %s440 = scalar_select %p439, %s438, 999
      %s441 = scalar_lea.vmem %s3, %s440
      %p442 = pneg %p115
      %p443 = pneg %p112
      %s444 = smul.u32 %s26, 8
      %s445 = sadd.s32 %s444, 3
      %s446 = sld [smem:[#allocation3 + %s445]]
      %p447 = scmp.lt.s32.totalorder %s446, 999
      %s448 = scalar_select %p447, %s446, 999
      %s449 = scalar_lea.vmem %s4, %s448
      %p450 = pneg %p147
      %p451 = pneg %p144
      %s452 = smul.u32 %s26, 8
      %s453 = sadd.s32 %s452, 4
      %s454 = sld [smem:[#allocation3 + %s453]]
      %p455 = scmp.lt.s32.totalorder %s454, 999
      %s456 = scalar_select %p455, %s454, 999
      %s457 = scalar_lea.vmem %s5, %s456
      %p458 = pneg %p179
      %p459 = pneg %p176
      %s460 = smul.u32 %s26, 8
      %s461 = sadd.s32 %s460, 5
      %s462 = sld [smem:[#allocation3 + %s461]]
      %p463 = scmp.lt.s32.totalorder %s462, 999
      %s464 = scalar_select %p463, %s462, 999
      %s465 = scalar_lea.vmem %s6, %s464
      %p466 = pneg %p211
      %p467 = pneg %p208
      %s468 = smul.u32 %s26, 8
      %s469 = sadd.s32 %s468, 6
      %s470 = sld [smem:[#allocation3 + %s469]]
      %p471 = scmp.lt.s32.totalorder %s470, 999
      %s472 = scalar_select %p471, %s470, 999
      %s473 = scalar_lea.vmem %s7, %s472
      %p474 = pneg %p243
      %p475 = pneg %p240
      %s476 = smul.u32 %s26, 8
      %s477 = sadd.s32 %s476, 7
      %s478 = sld [smem:[#allocation3 + %s477]]
      %p479 = scmp.lt.s32.totalorder %s478, 999
      %s480 = scalar_select %p479, %s478, 999
      %s481 = scalar_lea.vmem %s8, %s480
      %p482 = pneg %p275
      %p483 = pneg %p272
      %p484 = pneg %p301
      %p485 = pneg %p298
      %s486 = smul.u32 8, %s26
      %p487 = scmp.lt.s32.totalorder %s486, 575
      %s488 = scalar_select %p487, %s486, 575
      %s489 = scalar_lea.vmem %s9, %s488
      %s490 = smul.u32 %s26, 8
      %s491 = sld [smem:[#allocation3 + %s490]]
      %p492 = scmp.lt.s32.totalorder %s491, 999
      %s493 = scalar_select %p492, %s491, 999
      %s494 = scalar_lea.vmem %s1, %s493
      %s495 = smul.u32 %s26, 8
      %s496 = sld [smem:[#allocation3 + %s495]]
      %s497 = smul.u32 %s26, 8
      %s498 = sadd.s32 %s497, 1
      %s499 = sld [smem:[#allocation3 + %s498]]
      %p500 = scmp.lt.s32.totalorder %s499, 999
      %s501 = scalar_select %p500, %s499, 999
      %s502 = scalar_lea.vmem %s2, %s501
      %s503 = smul.u32 %s26, 8
      %s504 = sadd.s32 %s503, 1
      %s505 = sld [smem:[#allocation3 + %s504]]
      %s506 = smul.u32 %s26, 8
      %s507 = sadd.s32 %s506, 2
      %s508 = sld [smem:[#allocation3 + %s507]]
      %p509 = scmp.lt.s32.totalorder %s508, 999
      %s510 = scalar_select %p509, %s508, 999
      %s511 = scalar_lea.vmem %s3, %s510
      %s512 = smul.u32 %s26, 8
      %s513 = sadd.s32 %s512, 2
      %s514 = sld [smem:[#allocation3 + %s513]]
      %s515 = smul.u32 %s26, 8
      %s516 = sadd.s32 %s515, 3
      %s517 = sld [smem:[#allocation3 + %s516]]
      %p518 = scmp.lt.s32.totalorder %s517, 999
      %s519 = scalar_select %p518, %s517, 999
      %s520 = scalar_lea.vmem %s4, %s519
      %s521 = smul.u32 %s26, 8
      %s522 = sadd.s32 %s521, 3
      %s523 = sld [smem:[#allocation3 + %s522]]
      %s524 = smul.u32 %s26, 8
      %s525 = sadd.s32 %s524, 4
      %s526 = sld [smem:[#allocation3 + %s525]]
      %p527 = scmp.lt.s32.totalorder %s526, 999
      %s528 = scalar_select %p527, %s526, 999
      %s529 = scalar_lea.vmem %s5, %s528
      %s530 = smul.u32 %s26, 8
      %s531 = sadd.s32 %s530, 4
      %s532 = sld [smem:[#allocation3 + %s531]]
      %s533 = smul.u32 %s26, 8
      %s534 = sadd.s32 %s533, 5
      %s535 = sld [smem:[#allocation3 + %s534]]
      %p536 = scmp.lt.s32.totalorder %s535, 999
      %s537 = scalar_select %p536, %s535, 999
      %s538 = scalar_lea.vmem %s6, %s537
      %s539 = smul.u32 %s26, 8
      %s540 = sadd.s32 %s539, 5
      %s541 = sld [smem:[#allocation3 + %s540]]
      %s542 = smul.u32 %s26, 8
      %s543 = sadd.s32 %s542, 6
      %s544 = sld [smem:[#allocation3 + %s543]]
      %p545 = scmp.lt.s32.totalorder %s544, 999
      %s546 = scalar_select %p545, %s544, 999
      %s547 = scalar_lea.vmem %s7, %s546
      %s548 = smul.u32 %s26, 8
      %s549 = sadd.s32 %s548, 6
      %s550 = sld [smem:[#allocation3 + %s549]]
      %s551 = smul.u32 %s26, 8
      %s552 = sadd.s32 %s551, 7
      %s553 = sld [smem:[#allocation3 + %s552]]
      %p554 = scmp.lt.s32.totalorder %s553, 999
      %s555 = scalar_select %p554, %s553, 999
      %s556 = scalar_lea.vmem %s8, %s555
      %s557 = smul.u32 %s26, 8
      %s558 = sadd.s32 %s557, 7
      %s559 = sld [smem:[#allocation3 + %s558]]
      %s560 = smul.u32 8, %s26
      %p561 = scmp.lt.s32.totalorder %s560, 575
      %s562 = scalar_select %p561, %s560, 575
      %s563 = scalar_lea.vmem %s9, %s562
      %s564 = smul.u32 8, %s26
      %v565 = vld [vmem:[%s494] sm:$0x1]
      %vm566 = vcmask 516096
      %567 = vst.msk [vmem:[%s563] sm:$0x1] %vm566, %v565
      %v568 = vld [vmem:[%s502] sm:$0x1]
      %s569 = scalar_lea.vmem %s563, 1
      %570 = vst.msk [vmem:[%s569] sm:$0x1] %vm566, %v568
      %v571 = vld [vmem:[%s511] sm:$0x1]
      %s572 = scalar_lea.vmem %s563, 2
      %573 = vst.msk [vmem:[%s572] sm:$0x1] %vm566, %v571
      %v574 = vld [vmem:[%s520] sm:$0x1]
      %s575 = scalar_lea.vmem %s563, 3
      %576 = vst.msk [vmem:[%s575] sm:$0x1] %vm566, %v574
      %v577 = vld [vmem:[%s529] sm:$0x1]
      %s578 = scalar_lea.vmem %s563, 4
      %579 = vst.msk [vmem:[%s578] sm:$0x1] %vm566, %v577
      %v580 = vld [vmem:[%s538] sm:$0x1]
      %s581 = scalar_lea.vmem %s563, 5
      %582 = vst.msk [vmem:[%s581] sm:$0x1] %vm566, %v580
      %v583 = vld [vmem:[%s547] sm:$0x1]
      %s584 = scalar_lea.vmem %s563, 6
      %585 = vst.msk [vmem:[%s584] sm:$0x1] %vm566, %v583
      %v586 = vld [vmem:[%s556] sm:$0x1]
      %s587 = scalar_lea.vmem %s563, 7
      %588 = vst.msk [vmem:[%s587] sm:$0x1] %vm566, %v586
      %s589 = smul.u32 8, %s26
      %p590 = scmp.lt.s32.totalorder %s589, 575
      %s591 = scalar_select %p590, %s589, 575
      %s592 = scalar_lea.vmem %s9, %s591
      // Predicated region
      $region53: #{tpu_custom_call.1} parent=51 // pred_check
        %p593 = pneg %p298
      $region54: #{tpu_custom_call.1} parent=51 // pred_check_branch
        %595 = sbr.rel (%p593) target = $region56
      $region55: #{tpu_custom_call.1} parent=51 // pred_region
        %s596 = smul.u32 8, %s26
      $region56: #{tpu_custom_call.1} parent=51 // pred_fallthru
        _
    $region52: #{tpu_custom_call.1} parent=5 // pred_fallthru
      _
    %p597 = scmp.le.s32.totalorder 2, %s21
    // Predicated region
    $region57: #{tpu_custom_call.1} parent=5 // pred_check
      %p598 = pneg %p597
    $region58: #{tpu_custom_call.1} parent=5 // pred_check_branch
      %600 = sbr.rel (%p598) target = $region60
    $region59: #{tpu_custom_call.1} parent=5 // pred_region
      %s601 = ssub.s32 %s21, 2
      // Predicated region
      $region61: #{tpu_custom_call.1} parent=59 // pred_check
        %p602 = pneg %p304
      $region62: #{tpu_custom_call.1} parent=59 // pred_check_branch
        %604 = sbr.rel (%p602) target = $region64
      $region63: #{tpu_custom_call.1} parent=59 // pred_region
        %s605 = smul.u32 8, %s27
        %p606 = scmp.lt.s32.totalorder %s605, 575
        %s607 = scalar_select %p606, %s605, 575
        %s608 = scalar_lea.vmem %s9, %s607
      $region64: #{tpu_custom_call.1} parent=59 // pred_fallthru
        _
    $region60: #{tpu_custom_call.1} parent=5 // pred_fallthru
      _
  $region6: #{tpu_custom_call.1} parent=0 // loop_footer
    %s25 = sadd.s32 1, %s21
  $region7: #{tpu_custom_call.1} parent=0 // loop_footer_branch
    %20 = sbr.rel target = $region3
  $region8: #{tpu_custom_call.1} parent=0 // loop_exit
    _

</llo_original>
